<compile_context>
chip_gen: v7x
topology: tpu7x:2x2x1
jax: 0.10.0
libtpu: 0.0.40
codegen_flags: <defaults>
</compile_context>

<pallas_src>
import functools

import jax
import jax.numpy as jnp
from jax.experimental import pallas as pl
from jax.experimental.pallas import tpu as pltpu


# ------------------------------- kernel -------------------------------------
def chomp2d_kernel(x_ref, o_ref):
    # x_ref: (B, C, H, W) in VMEM;  o_ref: (B, C, H, W - chomp) in VMEM.
    w_out = o_ref.shape[-1]
    x = x_ref[...]                      # full-tile load
    o_ref[...] = x[..., :w_out]         # static prefix crop along lane axis


# ------------------------------ wrapper --------------------------------------
@functools.partial(jax.jit, static_argnames=("chomp_size",))
def chomp2d(x, chomp_size):
    b, c, h, w = x.shape
    w_out = w - chomp_size
    assert w_out > 0, "chomp_size must be smaller than the last dimension"
    vmem = pl.BlockSpec(memory_space=pltpu.MemorySpace.VMEM)
    return pl.pallas_call(
        chomp2d_kernel,
        out_shape=jax.ShapeDtypeStruct((b, c, h, w_out), x.dtype),
        in_specs=[vmem],
        out_specs=vmem,
    )(x)


# --------------------------------- main --------------------------------------
if __name__ == "__main__":
    B, C, H, W = 2, 4, 16, 16          # shapes implied by the 4-D forward
    CHOMP = 3                           # typical (kernel_size-1)*dilation pad

    x = jax.random.normal(jax.random.PRNGKey(0), (B, C, H, W), dtype=jnp.float32)

    out = jax.block_until_ready(chomp2d(x, CHOMP))

    ref = x[:, :, :, : W - CHOMP]       # PyTorch: x[:, :, :, :-chomp_size]
    assert out.shape == (B, C, H, W - CHOMP), out.shape
    assert jnp.array_equal(out, ref), (
        f"max abs diff {jnp.max(jnp.abs(out - ref))}")

    print("KERNEL_OK")
</pallas_src>

<mosaic_0001>
module attributes {stable_mosaic.version = 11 : i64} {
  func.func @chomp2d_kernel(%arg0: memref<2x4x16x16xf32, #tpu.memory_space<vmem>>, %arg1: memref<2x4x16x13xf32, #tpu.memory_space<vmem>>) attributes {dimension_semantics = [], scalar_prefetch = 0 : i64, scratch_operands = 0 : i64, tpu.core_type = #tpu.core_type<tc>} {
    %c0 = arith.constant 0 : index
    %c0_0 = arith.constant 0 : index
    %c0_1 = arith.constant 0 : index
    %c0_2 = arith.constant 0 : index
    %0 = vector.load %arg0[%c0, %c0_0, %c0_1, %c0_2] : memref<2x4x16x16xf32, #tpu.memory_space<vmem>>, vector<2x4x16x16xf32>
    %1 = vector.extract_strided_slice %0 {offsets = [0, 0, 0, 0], sizes = [2, 4, 16, 13], strides = [1, 1, 1, 1]} : vector<2x4x16x16xf32> to vector<2x4x16x13xf32>
    %c0_3 = arith.constant 0 : index
    %c0_4 = arith.constant 0 : index
    %c0_5 = arith.constant 0 : index
    %c0_6 = arith.constant 0 : index
    %2 = vector.load %arg1[%c0_3, %c0_4, %c0_5, %c0_6] : memref<2x4x16x13xf32, #tpu.memory_space<vmem>>, vector<2x4x16x13xf32>
    tpu.vector_store %arg1[%c0_3, %c0_4, %c0_5, %c0_6], %1 {strides = array<i32>} : memref<2x4x16x13xf32, #tpu.memory_space<vmem>>, vector<2x4x16x13xf32>,
    return
  }
}

</mosaic_0001>

<llo_original>
// kernel: chomp2d.1
$region0: #{chomp2d.1}
  #allocation0 [shape = 'u32[]', space=smem, size = 0x4, offset = 0x4, fixed_abs, tag = 'smem constant byte address 0x4 - core index']
  #allocation1 [shape = 'u32[144,128]{1,0:T(1,128)}', space=vmem, size = 0x12000, scoped, tag = 'internal scratch']
  %s0 = inlined_call_operand.hbm [shape: f32[2,4,16,16], index: 0, kind: input, shape index: {}]
  %s1 = inlined_call_operand.vmem [shape: f32[2,4,16,13], index: 1, kind: output, shape index: {}]
  %s2 = sld [smem:[#allocation0]]
  $region18: #{chomp2d.1} parent=0
    _
  %s4 = ssub.s32 1, %s2
  %s5 = scalar_select 0, %s4, %s2
  $region1: #{chomp2d.1} parent=0
    #allocation2 [shape = 'u8[65536]{0}', space=vmem, size = 0x10000, scoped, tag = 'input window, operand 0, single buffered']
    #allocation3 [shape = 's32[1]{0}', space=sflag, size = 0x4, scoped, tag = 'scoped memory for chomp2d.1']
    %6 = vsyncpa [#allocation3], 0
    // Predicated region
    $region2: #{chomp2d.1} parent=1 // pred_check
      _
    $region3: #{chomp2d.1} parent=1 // pred_check_branch
      %8 = sbr.rel (0) target = $region5
    $region4: #{chomp2d.1} parent=1 // pred_region
      %s10 = ssub.s32 2048, 2048
      %11 = vsyncadd [#allocation3], %s10
      %s12 = sshll.u32 [#allocation2], 4
      %s13 = int_to_ptr.vmem [resolvable:$true] %s12
      %18 = dma.hbm_to_vmem [thread:$0]  %s0, 2048, %s13, [#allocation3], 128, 128, 8
    $region5: #{chomp2d.1} parent=1 // pred_fallthru
      _
    // Predicated region
    $region6: #{chomp2d.1} parent=1 // pred_check
      _
    $region7: #{chomp2d.1} parent=1 // pred_check_branch
      %20 = sbr.rel (0) target = $region9
    $region8: #{chomp2d.1} parent=1 // pred_region
      %21 = dma.done [#allocation3], 2048
    $region9: #{chomp2d.1} parent=1 // pred_fallthru
      _
    %v22 = vld [vmem:[#allocation2] sm:$0xff]
    %v23 = vld [vmem:[#allocation2 + $0x8] sm:$0xff]
    %v24 = vld [vmem:[#allocation2 + $0x10] sm:$0xff]
    %v25 = vld [vmem:[#allocation2 + $0x18] sm:$0xff]
    %v26 = vld [vmem:[#allocation2 + $0x20] sm:$0xff]
    %v27 = vld [vmem:[#allocation2 + $0x28] sm:$0xff]
    %v28 = vld [vmem:[#allocation2 + $0x30] sm:$0xff]
    %v29 = vld [vmem:[#allocation2 + $0x38] sm:$0xff]
    %v30 = vld [vmem:[#allocation2 + $0x40] sm:$0xff]
    %v31 = vld [vmem:[#allocation2 + $0x48] sm:$0xff]
    %v32 = vld [vmem:[#allocation2 + $0x50] sm:$0xff]
    %v33 = vld [vmem:[#allocation2 + $0x58] sm:$0xff]
    %v34 = vld [vmem:[#allocation2 + $0x60] sm:$0xff]
    %v35 = vld [vmem:[#allocation2 + $0x68] sm:$0xff]
    %v36 = vld [vmem:[#allocation2 + $0x70] sm:$0xff]
    %v37 = vld [vmem:[#allocation2 + $0x78] sm:$0xff]
    %vm38 = vcmask 105472
    %39 = vst.msk [vmem:[%s1] sm:$0xff] %vm38, %v22
    %40 = vst.msk [vmem:[%s1 + $0x8] sm:$0xff] %vm38, %v23
    %41 = vst.msk [vmem:[%s1 + $0x10] sm:$0xff] %vm38, %v24
    %42 = vst.msk [vmem:[%s1 + $0x18] sm:$0xff] %vm38, %v25
    %43 = vst.msk [vmem:[%s1 + $0x20] sm:$0xff] %vm38, %v26
    %44 = vst.msk [vmem:[%s1 + $0x28] sm:$0xff] %vm38, %v27
    %45 = vst.msk [vmem:[%s1 + $0x30] sm:$0xff] %vm38, %v28
    %46 = vst.msk [vmem:[%s1 + $0x38] sm:$0xff] %vm38, %v29
    %47 = vst.msk [vmem:[%s1 + $0x40] sm:$0xff] %vm38, %v30
    %48 = vst.msk [vmem:[%s1 + $0x48] sm:$0xff] %vm38, %v31
    %49 = vst.msk [vmem:[%s1 + $0x50] sm:$0xff] %vm38, %v32
    %50 = vst.msk [vmem:[%s1 + $0x58] sm:$0xff] %vm38, %v33
    %51 = vst.msk [vmem:[%s1 + $0x60] sm:$0xff] %vm38, %v34
    %52 = vst.msk [vmem:[%s1 + $0x68] sm:$0xff] %vm38, %v35
    %53 = vst.msk [vmem:[%s1 + $0x70] sm:$0xff] %vm38, %v36
    %54 = vst.msk [vmem:[%s1 + $0x78] sm:$0xff] %vm38, %v37
    // Predicated region
    $region10: #{chomp2d.1} parent=1 // pred_check
      _
    $region11: #{chomp2d.1} parent=1 // pred_check_branch
      %56 = sbr.rel (0) target = $region13
    $region12: #{chomp2d.1} parent=1 // pred_region
      _
    $region13: #{chomp2d.1} parent=1 // pred_fallthru
      _
    // Predicated region
    $region14: #{chomp2d.1} parent=1 // pred_check
      _
    $region15: #{chomp2d.1} parent=1 // pred_check_branch
      %58 = sbr.rel (0) target = $region17
    $region16: #{chomp2d.1} parent=1 // pred_region
      _
    $region17: #{chomp2d.1} parent=1 // pred_fallthru
      _
    %59 = vsyncpa [#allocation3], 1

</llo_original>
